<compile_context>
chip_gen: v5e
topology: v5e:2x2
jax: 0.10.0
libtpu: 0.0.40
codegen_flags: <defaults>
</compile_context>

<pallas_src>
import jax
import jax.numpy as jnp
from jax.experimental import pallas as pl
from jax.experimental.pallas import tpu as pltpu

_HIGHEST = jax.lax.Precision.HIGHEST

_LANE = 128
_SUBLANE = 8
# Raw HBM bytes of freq streamed per grid step (~2 MiB keeps the ~0.35 us
# fixed per-step cost well under 10% of the DMA window even on v5e, while the
# double-buffered, lane-padded VMEM footprint stays < ~20 MiB on every gen).
_FREQ_BYTES_PER_STEP = 2 * 1024 * 1024


def _round_up(x, m):
    return -(-x // m) * m


def _round_down(x, m):
    return (x // m) * m


def candidate_filter_kernel(cat_ref, freq_ref, table_ref, bias_ref, out_ref):
    # cat_ref   : (1, TB) i32 -- category index per batch row
    # freq_ref  : (TB, L) f32 -- streamed batch tile (the only large input)
    # table_ref : (R, L)  f32 -- folded per-category position table (grid-resident)
    # bias_ref  : (R, 1)  f32 -- folded per-category bias (grid-resident)
    # out_ref   : (1, TB) f32 -- lane-dense output row
    #
    # table @ freq.T keeps the MXU result and the output lane-dense in the
    # batch dimension; the transposed freq operand is consumed inside the MXU
    # matmul (no separate XLU pass over the large tile, no result transpose).
    pos_t = jax.lax.dot_general(
        table_ref[...], freq_ref[...],
        dimension_numbers=(((1,), (1,)), ((), ())),   # (R, L) x (TB, L)^T -> (R, TB)
        preferred_element_type=jnp.float32,
    )
    rows = jax.lax.broadcasted_iota(jnp.int32, pos_t.shape, 0)   # (R, TB)
    biased = pos_t + bias_ref[...]                               # add cat_bias[r] per row
    picked = jnp.where(rows == cat_ref[...], biased, 0.0)        # keep row cat[b]
    out_ref[...] = jnp.sum(picked, axis=0, keepdims=True)        # (1, TB)


def init_params(key, cat_num, freq_max_len):
    k_feat, k_w1, k_b1, k_w2, k_b2 = jax.random.split(key, 5)
    return {
        # nn.init.constant_(..., 1.0) in the module
        "overall_pos_emb": jnp.ones((1, freq_max_len), jnp.float32),
        "cat_pos_weight": jnp.ones((cat_num, freq_max_len), jnp.float32),
        # nn.Embedding default init: N(0, 1)
        "cat_feat_emb": jax.random.normal(k_feat, (cat_num, 14), jnp.float32),
        # nn.Linear(16, 32): weight (32, 16), bias (32,) ~ U(-1/4, 1/4)
        "w1": jax.random.uniform(k_w1, (32, 16), jnp.float32, -0.25, 0.25),
        "b1": jax.random.uniform(k_b1, (32,), jnp.float32, -0.25, 0.25),
        # nn.Linear(32, 1): weight (1, 32), bias (1,)
        "w2": jax.random.uniform(k_w2, (1, 32), jnp.float32,
                                 -1.0 / jnp.sqrt(32.0), 1.0 / jnp.sqrt(32.0)),
        "b2": jax.random.uniform(k_b2, (1,), jnp.float32,
                                 -1.0 / jnp.sqrt(32.0), 1.0 / jnp.sqrt(32.0)),
    }


def _fold_params(params):
    """Fold the two bias-only Linear layers and the per-cat feature embedding."""
    cat_num, freq_max_len = params["cat_pos_weight"].shape
    # Linear(16,32) -> Linear(32,1) with no activation in between:
    #   out = feat @ (W1.T @ W2.T) + (b1 @ W2.T + b2)
    w_comb = jnp.dot(params["w1"].T, params["w2"].T, precision=_HIGHEST)      # (16, 1)
    b_comb = jnp.dot(params["b1"], params["w2"].T, precision=_HIGHEST) + params["b2"]  # (1,)
    w_cat = w_comb[0, 0]
    w_all = w_comb[1, 0]
    w_feat = w_comb[2:, 0]                                                    # (14,)
    # Per-category scalar: the entire cat_feat_emb contribution + folded bias.
    cat_bias = jnp.dot(params["cat_feat_emb"], w_feat, precision=_HIGHEST) + b_comb[0]  # (C,)
    # Per-category position table with the "overall" row folded in; pad rows to
    # a sublane multiple (>= 8).  Padded rows are zero and never selected.
    rows = max(_SUBLANE, _round_up(cat_num, _SUBLANE))
    table = jnp.zeros((rows, freq_max_len), jnp.float32)
    table = table.at[:cat_num].set(
        w_cat * params["cat_pos_weight"] + w_all * params["overall_pos_emb"])
    bias_col = jnp.zeros((rows, 1), jnp.float32).at[:cat_num, 0].set(cat_bias)
    return table, bias_col


def _pick_batch_tile(batch, seq_len):
    """Byte-budget batch tile (128-multiple), keeping >= 2 grid steps when possible."""
    b128 = max(_LANE, _round_up(batch, _LANE))
    tb_budget = max(_LANE, _round_down(_FREQ_BYTES_PER_STEP // (seq_len * 4), _LANE))
    # Cap at half the batch so v7x's two TensorCores both get work
    # (dimension_semantics=("parallel",) shards the grid across them).
    if b128 >= 2 * _LANE:
        tb_half = max(_LANE, _round_down(b128 // 2, _LANE))
    else:
        tb_half = b128
    tb = min(tb_budget, tb_half, b128)
    padded_batch = _round_up(b128, tb)
    return tb, padded_batch


def _vmem_limit_bytes(tb, seq_len):
    """Scoped-VMEM request sized for the double-buffered, lane-padded blocks."""
    lane_padded_l = _round_up(seq_len, _LANE)            # (tb, 32) f32 pads to 128 lanes
    freq_bufs = 2 * tb * lane_padded_l * 4               # double-buffered freq tile
    row_bufs = 2 * 2 * _SUBLANE * tb * 4                 # cat + out rows, sublane-padded
    needed = freq_bufs + row_bufs + 10 * 1024 * 1024     # table/bias/compiler scratch slack
    return int(min(max(needed, 16 * 1024 * 1024), 48 * 1024 * 1024))


def candidate_filter_forward(cat, freq_vec_seq, params):
    """v1 forward. cat: int32 (B,), freq_vec_seq: float32 (B, L) -> (B, 1)."""
    batch, seq_len = freq_vec_seq.shape
    table, bias_col = _fold_params(params)
    rows = table.shape[0]

    tb, padded_batch = _pick_batch_tile(batch, seq_len)
    grid = (padded_batch // tb,)

    cat = cat.astype(jnp.int32)
    freq = freq_vec_seq.astype(jnp.float32)
    # TODO(synk): if the upstream producer can emit freq in bfloat16, stream it
    # as bf16 here (f32 accumulation is preserved via preferred_element_type)
    # to halve HBM traffic on this purely bandwidth-bound kernel.
    if padded_batch != batch:
        pad = padded_batch - batch
        cat = jnp.pad(cat, (0, pad))
        freq = jnp.pad(freq, ((0, pad), (0, 0)))
    cat_row = cat.reshape(1, padded_batch)

    cost = pl.CostEstimate(
        flops=2 * padded_batch * seq_len * rows,
        transcendentals=0,
        bytes_accessed=(padded_batch * seq_len * 4      # freq read
                        + padded_batch * 4              # cat read
                        + padded_batch * 4              # out write
                        + rows * (seq_len + 1) * 4),    # table + bias
    )

    out_row = pl.pallas_call(
        candidate_filter_kernel,
        out_shape=jax.ShapeDtypeStruct((1, padded_batch), jnp.float32),
        grid=grid,
        in_specs=[
            pl.BlockSpec((1, tb), lambda i: (0, i)),          # cat indices (tiny)
            pl.BlockSpec((tb, seq_len), lambda i: (i, 0)),    # freq: streamed batch tile
            pl.BlockSpec(table.shape, lambda i: (0, 0)),      # folded table: grid-resident
            pl.BlockSpec(bias_col.shape, lambda i: (0, 0)),   # folded per-cat bias column
        ],
        out_specs=pl.BlockSpec((1, tb), lambda i: (0, i)),    # lane-dense output row
        compiler_params=pltpu.CompilerParams(
            dimension_semantics=("parallel",),                # shard batch over TCs (v7x)
            vmem_limit_bytes=_vmem_limit_bytes(tb, seq_len),
        ),
        cost_estimate=cost,
    )(cat_row, freq, table, bias_col)

    return out_row[0, :batch].reshape(batch, 1)


def reference_forward(cat, freq_vec_seq, params):
    """Pure-JAX reference mirroring the PyTorch v1 forward exactly."""
    cat_pos_w = params["cat_pos_weight"][cat]
    cat_rep = jnp.sum(freq_vec_seq * cat_pos_w, axis=1, keepdims=True)
    overall_w = params["overall_pos_emb"][jnp.zeros_like(cat)]
    overall_rep = jnp.sum(freq_vec_seq * overall_w, axis=1, keepdims=True)
    cat_feat = params["cat_feat_emb"][cat]
    feat = jnp.concatenate([cat_rep, overall_rep, cat_feat], axis=1)
    hidden = jnp.dot(feat, params["w1"].T, precision=_HIGHEST) + params["b1"]
    return jnp.dot(hidden, params["w2"].T, precision=_HIGHEST) + params["b2"]


if __name__ == "__main__":
    cat_num = 6
    freq_max_len = 32
    batch = 2048   # small (256 KiB of freq data) but exercises a 2-step parallel grid

    key = jax.random.PRNGKey(0)
    k_params, k_cat, k_freq = jax.random.split(key, 3)

    params = init_params(k_params, cat_num, freq_max_len)
    cat = jax.random.randint(k_cat, (batch,), 0, cat_num, dtype=jnp.int32)
    freq_vec_seq = jax.random.uniform(k_freq, (batch, freq_max_len), jnp.float32)

    out = jax.jit(candidate_filter_forward)(cat, freq_vec_seq, params)
    out = jax.block_until_ready(out)

    ref = reference_forward(cat, freq_vec_seq, params)
    assert out.shape == (batch, 1)
    max_err = float(jnp.max(jnp.abs(out - ref)))
    assert jnp.allclose(out, ref, rtol=1e-4, atol=1e-4), ("max abs err", max_err)

    print("KERNEL_OK")
</pallas_src>

<mosaic_0001>
module attributes {stable_mosaic.version = 11 : i64} {
  func.func @candidate_filter_kernel(%arg0: i32, %arg1: memref<1x1024xi32, #tpu.memory_space<vmem>>, %arg2: memref<1024x32xf32, #tpu.memory_space<vmem>>, %arg3: memref<8x32xf32, #tpu.memory_space<vmem>>, %arg4: memref<8x1xf32, #tpu.memory_space<vmem>>, %arg5: memref<1x1024xf32, #tpu.memory_space<vmem>>) attributes {dimension_semantics = [#tpu.dimension_semantics<parallel>], iteration_bounds = array<i64: 2>, scalar_prefetch = 0 : i64, scratch_operands = 0 : i64, tpu.core_type = #tpu.core_type<tc>, window_params = [{transform_indices = @transform_0, window_bounds = array<i64: 1, 1024>}, {transform_indices = @transform_1, window_bounds = array<i64: 1024, 32>}, {pipeline_mode = #tpu.pipeline_mode<synchronous>, transform_indices = @transform_2, window_bounds = array<i64: 8, 32>}, {pipeline_mode = #tpu.pipeline_mode<synchronous>, transform_indices = @transform_3, window_bounds = array<i64: 8, 1>}, {transform_indices = @transform_4, window_bounds = array<i64: 1, 1024>}]} {
    %c0 = arith.constant 0 : index
    %c0_0 = arith.constant 0 : index
    %0 = vector.load %arg3[%c0, %c0_0] : memref<8x32xf32, #tpu.memory_space<vmem>>, vector<8x32xf32>
    %c0_1 = arith.constant 0 : index
    %c0_2 = arith.constant 0 : index
    %1 = vector.load %arg2[%c0_1, %c0_2] : memref<1024x32xf32, #tpu.memory_space<vmem>>, vector<1024x32xf32>
    %cst = arith.constant dense<0.000000e+00> : vector<8x1024xf32>
    %2 = tpu.matmul %0, %1, %cst {dimension_numbers = #tpu.dot_dimension_numbers<[1], [1], [0], [0], [0, 0, 1, 0], [], []>} : vector<8x32xf32>, vector<1024x32xf32>, vector<8x1024xf32> -> vector<8x1024xf32>
    %3 = tpu.iota {dimensions = array<i32: 0>} : vector<8x1024xi32>
    %c0_3 = arith.constant 0 : index
    %c0_4 = arith.constant 0 : index
    %4 = vector.load %arg4[%c0_3, %c0_4] : memref<8x1xf32, #tpu.memory_space<vmem>>, vector<8x1xf32>
    %5 = vector.broadcast %4 : vector<8x1xf32> to vector<8x1024xf32>
    %6 = arith.addf %2, %5 : vector<8x1024xf32>
    %c0_5 = arith.constant 0 : index
    %c0_6 = arith.constant 0 : index
    %7 = vector.load %arg1[%c0_5, %c0_6] : memref<1x1024xi32, #tpu.memory_space<vmem>>, vector<1x1024xi32>
    %8 = vector.broadcast %7 : vector<1x1024xi32> to vector<8x1024xi32>
    %9 = arith.cmpi eq, %3, %8 : vector<8x1024xi32>
    %cst_7 = arith.constant 0.000000e+00 : f32
    %10 = vector.broadcast %cst_7 : f32 to vector<8x1024xf32>
    %11 = arith.select %9, %6, %10 : vector<8x1024xi1>, vector<8x1024xf32>
    %cst_8 = arith.constant dense<0.000000e+00> : vector<1024xf32>
    %12 = vector.multi_reduction <add>, %11, %cst_8 [0] : vector<8x1024xf32> to vector<1024xf32>
    %13 = vector.shape_cast %12 : vector<1024xf32> to vector<1x1024xf32>
    %c0_9 = arith.constant 0 : index
    %c0_10 = arith.constant 0 : index
    %14 = vector.load %arg5[%c0_9, %c0_10] : memref<1x1024xf32, #tpu.memory_space<vmem>>, vector<1x1024xf32>
    tpu.vector_store %arg5[%c0_9, %c0_10], %13 {strides = array<i32>} : memref<1x1024xf32, #tpu.memory_space<vmem>>, vector<1x1024xf32>,
    return
  }
  func.func @transform_0(%arg0: i32) -> (i32, i32) {
    %c0_i32 = arith.constant 0 : i32
    %c0_i32_0 = arith.constant 0 : i32
    return %c0_i32, %arg0 : i32, i32
  }
  func.func @transform_1(%arg0: i32) -> (i32, i32) {
    %c0_i32 = arith.constant 0 : i32
    %c0_i32_0 = arith.constant 0 : i32
    return %arg0, %c0_i32 : i32, i32
  }
  func.func @transform_2(%arg0: i32) -> (i32, i32) {
    %c0_i32 = arith.constant 0 : i32
    %c0_i32_0 = arith.constant 0 : i32
    %c0_i32_1 = arith.constant 0 : i32
    return %c0_i32, %c0_i32_0 : i32, i32
  }
  func.func @transform_3(%arg0: i32) -> (i32, i32) {
    %c0_i32 = arith.constant 0 : i32
    %c0_i32_0 = arith.constant 0 : i32
    %c0_i32_1 = arith.constant 0 : i32
    return %c0_i32, %c0_i32_0 : i32, i32
  }
  func.func @transform_4(%arg0: i32) -> (i32, i32) {
    %c0_i32 = arith.constant 0 : i32
    %c0_i32_0 = arith.constant 0 : i32
    return %c0_i32, %arg0 : i32, i32
  }
}

</mosaic_0001>

<llo_original>
// kernel: candidate_filter_forward.1
$region0: #{candidate_filter_forward.1}
  #allocation0 [shape = 'u32[]', space=smem, size = 0x4, offset = 0x4, fixed_abs, tag = 'smem constant byte address 0x4 - core index']
  #allocation1 [shape = 'u32[72,128]{1,0:T(1,128)}', space=vmem, size = 0x9000, scoped, tag = 'internal scratch']
  %s0 = inlined_call_operand.vmem [shape: s32[1,2048], index: 0, kind: input, shape index: {}]
  %s1 = inlined_call_operand.vmem [shape: f32[2048,32], index: 1, kind: input, shape index: {}]
  %s2 = inlined_call_operand.vmem [shape: f32[8,32], index: 2, kind: input, shape index: {}]
  %s3 = inlined_call_operand.vmem [shape: f32[8,1], index: 3, kind: input, shape index: {}]
  %s4 = inlined_call_operand.hbm [shape: f32[1,2048], index: 4, kind: output, shape index: {}]
  %s5 = sld [smem:[#allocation0]]
  $region49: #{candidate_filter_forward.1} parent=0
    _
  %s7 = ssub.s32 1, %s5
  %s8 = scalar_select 0, %s7, %s5
  $region1: #{candidate_filter_forward.1} parent=0
    #allocation2 [shape = 'u8[8192]{0}', space=vmem, size = 0x2000, scoped, tag = 'output window, operand 0']
    #allocation3 [shape = 's32[2]{0}', space=sflag, size = 0x8, scoped, tag = 'scoped memory for candidate_filter_forward.1']
    %9 = vsyncpa [#allocation3], 0
    %s10 = scalar_lea.sflag [#allocation3], 1
    %11 = vsyncpa %s10, 0
    loop: start=0, step=1, limit=4
    $region2: #{candidate_filter_forward.1} parent=1 // loop_pre_header
      _
    $region3: #{candidate_filter_forward.1} parent=1 // loop_header
      %s13 = sphi 0, %s17
      %p14 = scmp.ge.s32.totalorder %s13, 4
      %s23 = sphi 0, %s25
      %s26 = sphi 0, %s23
      %s27 = sphi 0, %s26
      %s43 = sphi 0, %s27
      %s49 = sphi 0, %s51
      %s52 = sphi 0, %s49
      %s53 = sphi 0, %s52
      %s69 = sphi 0, %s53
      %s73 = sphi 0, %s73
      %s75 = sphi 0, %s73
      %s76 = sphi 0, %s75
      %s90 = sphi 0, %s76
      %s94 = sphi 0, %s94
      %s96 = sphi 0, %s94
      %s97 = sphi 0, %s96
      %s111 = sphi 0, %s97
      %s117 = sphi 0, %s119
      %s120 = sphi 0, %s117
      %s121 = sphi 0, %s120
      %s137 = sphi 0, %s121
    $region4: #{candidate_filter_forward.1} parent=1 // loop_header_branch
      %16 = sbr.rel (%p14) target = $region8
    $region5: #{candidate_filter_forward.1} parent=1 // loop_body
      %s18 = ssub.s32 %s13, 1
      %s19 = ssub.s32 %s13, 2
      %s20 = sadd.s32 %s13, 1
      %s21 = ssub.s32 %s13, %s20
      %p22 = scmp.eq.s32.totalorder %s21, 0
      %s24 = sadd.s32 %s23, 1
      %s25 = scalar_select %p22, %s23, %s24
      %p28 = pneg %p22
      %p29 = scmp.eq.s32.totalorder %s13, 1
      %p30 = por %p28, %p29
      %p31 = scmp.ne.s32.totalorder %s23, %s26
      %p32 = scmp.eq.s32.totalorder %s13, 0
      %p33 = por %p31, %p32
      %p34 = scmp.ne.s32.totalorder %s23, %s26
      %p35 = scmp.eq.s32.totalorder %s18, 1
      %p36 = por %p34, %p35
      %p37 = scmp.ne.s32.totalorder %s26, %s27
      %p38 = scmp.eq.s32.totalorder %s18, 0
      %p39 = por %p37, %p38
      %p40 = scmp.ne.s32.totalorder %s26, %s27
      %p41 = scmp.eq.s32.totalorder %s19, 1
      %p42 = por %p40, %p41
      %p44 = scmp.ne.s32.totalorder %s27, %s43
      %p45 = scmp.eq.s32.totalorder %s19, 0
      %p46 = por %p44, %p45
      %s47 = ssub.s32 %s13, %s20
      %p48 = scmp.eq.s32.totalorder %s47, 0
      %s50 = sadd.s32 %s49, 1
      %s51 = scalar_select %p48, %s49, %s50
      %p54 = pneg %p48
      %p55 = scmp.eq.s32.totalorder %s13, 1
      %p56 = por %p54, %p55
      %p57 = scmp.ne.s32.totalorder %s49, %s52
      %p58 = scmp.eq.s32.totalorder %s13, 0
      %p59 = por %p57, %p58
      %p60 = scmp.ne.s32.totalorder %s49, %s52
      %p61 = scmp.eq.s32.totalorder %s18, 1
      %p62 = por %p60, %p61
      %p63 = scmp.ne.s32.totalorder %s52, %s53
      %p64 = scmp.eq.s32.totalorder %s18, 0
      %p65 = por %p63, %p64
      %p66 = scmp.ne.s32.totalorder %s52, %s53
      %p67 = scmp.eq.s32.totalorder %s19, 1
      %p68 = por %p66, %p67
      %p70 = scmp.ne.s32.totalorder %s53, %s69
      %p71 = scmp.eq.s32.totalorder %s19, 0
      %p72 = por %p70, %p71
      %s74 = sadd.s32 %s73, 1
      %p77 = scmp.eq.s32.totalorder %s13, 1
      %p78 = scmp.ne.s32.totalorder %s73, %s75
      %p79 = scmp.eq.s32.totalorder %s13, 0
      %p80 = por %p78, %p79
      %p81 = scmp.ne.s32.totalorder %s73, %s75
      %p82 = scmp.eq.s32.totalorder %s18, 1
      %p83 = por %p81, %p82
      %p84 = scmp.ne.s32.totalorder %s75, %s76
      %p85 = scmp.eq.s32.totalorder %s18, 0
      %p86 = por %p84, %p85
      %p87 = scmp.ne.s32.totalorder %s75, %s76
      %p88 = scmp.eq.s32.totalorder %s19, 1
      %p89 = por %p87, %p88
      %p91 = scmp.ne.s32.totalorder %s76, %s90
      %p92 = scmp.eq.s32.totalorder %s19, 0
      %p93 = por %p91, %p92
      %s95 = sadd.s32 %s94, 1
      %p98 = scmp.eq.s32.totalorder %s13, 1
      %p99 = scmp.ne.s32.totalorder %s94, %s96
      %p100 = scmp.eq.s32.totalorder %s13, 0
      %p101 = por %p99, %p100
      %p102 = scmp.ne.s32.totalorder %s94, %s96
      %p103 = scmp.eq.s32.totalorder %s18, 1
      %p104 = por %p102, %p103
      %p105 = scmp.ne.s32.totalorder %s96, %s97
      %p106 = scmp.eq.s32.totalorder %s18, 0
      %p107 = por %p105, %p106
      %p108 = scmp.ne.s32.totalorder %s96, %s97
      %p109 = scmp.eq.s32.totalorder %s19, 1
      %p110 = por %p108, %p109
      %p112 = scmp.ne.s32.totalorder %s97, %s111
      %p113 = scmp.eq.s32.totalorder %s19, 0
      %p114 = por %p112, %p113
      %s115 = ssub.s32 %s13, %s20
      %p116 = scmp.eq.s32.totalorder %s115, 0
      %s118 = sadd.s32 %s117, 1
      %s119 = scalar_select %p116, %s117, %s118
      %p122 = pneg %p116
      %p123 = scmp.eq.s32.totalorder %s13, 1
      %p124 = por %p122, %p123
      %p125 = scmp.ne.s32.totalorder %s117, %s120
      %p126 = scmp.eq.s32.totalorder %s13, 0
      %p127 = por %p125, %p126
      %p128 = scmp.ne.s32.totalorder %s117, %s120
      %p129 = scmp.eq.s32.totalorder %s18, 1
      %p130 = por %p128, %p129
      %p131 = scmp.ne.s32.totalorder %s120, %s121
      %p132 = scmp.eq.s32.totalorder %s18, 0
      %p133 = por %p131, %p132
      %p134 = scmp.ne.s32.totalorder %s120, %s121
      %p135 = scmp.eq.s32.totalorder %s19, 1
      %p136 = por %p134, %p135
      %p138 = scmp.ne.s32.totalorder %s121, %s137
      %p139 = scmp.eq.s32.totalorder %s19, 0
      %p140 = por %p138, %p139
      %p141 = scmp.le.s32.totalorder 1, %s13
      %p142 = scmp.lt.s32.totalorder %s13, 3
      %p143 = pnand %p141, %p142
      %p144 = pneg %p143
      // Predicated region
      $region9: #{candidate_filter_forward.1} parent=5 // pred_check
        _
      $region10: #{candidate_filter_forward.1} parent=5 // pred_check_branch
        %146 = sbr.rel (%p143) target = $region12
      $region11: #{candidate_filter_forward.1} parent=5 // pred_region
        %s147 = ssub.s32 %s13, 1
        // Predicated region
        $region13: #{candidate_filter_forward.1} parent=11 // pred_check
          %p148 = pneg %p86
        $region14: #{candidate_filter_forward.1} parent=11 // pred_check_branch
          %150 = sbr.rel (%p148) target = $region16
        $region15: #{candidate_filter_forward.1} parent=11 // pred_region
          _
        $region16: #{candidate_filter_forward.1} parent=11 // pred_fallthru
          _
        // Predicated region
        $region17: #{candidate_filter_forward.1} parent=11 // pred_check
          %p151 = pneg %p107
        $region18: #{candidate_filter_forward.1} parent=11 // pred_check_branch
          %153 = sbr.rel (%p151) target = $region20
        $region19: #{candidate_filter_forward.1} parent=11 // pred_region
          _
        $region20: #{candidate_filter_forward.1} parent=11 // pred_fallthru
          _
      $region12: #{candidate_filter_forward.1} parent=5 // pred_fallthru
        _
      %p154 = scmp.lt.s32.totalorder %s13, 2
      // Predicated region
      $region21: #{candidate_filter_forward.1} parent=5 // pred_check
        %p155 = pneg %p154
      $region22: #{candidate_filter_forward.1} parent=5 // pred_check_branch
        %157 = sbr.rel (%p155) target = $region24
      $region23: #{candidate_filter_forward.1} parent=5 // pred_region
        // Predicated region
        $region25: #{candidate_filter_forward.1} parent=23 // pred_check
          %p158 = pneg %p33
        $region26: #{candidate_filter_forward.1} parent=23 // pred_check_branch
          %160 = sbr.rel (%p158) target = $region28
        $region27: #{candidate_filter_forward.1} parent=23 // pred_region
          %s161 = smul.u32 8, %s13
          %p162 = scmp.lt.s32.totalorder %s161, 15
          %s163 = scalar_select %p162, %s161, 15
          %s164 = scalar_lea.vmem %s0, %s163
          %s165 = smul.u32 8, %s13
        $region28: #{candidate_filter_forward.1} parent=23 // pred_fallthru
          _
        // Predicated region
        $region29: #{candidate_filter_forward.1} parent=23 // pred_check
          %p166 = pneg %p59
        $region30: #{candidate_filter_forward.1} parent=23 // pred_check_branch
          %168 = sbr.rel (%p166) target = $region32
        $region31: #{candidate_filter_forward.1} parent=23 // pred_region
          %s169 = smul.u32 128, %s13
          %p170 = scmp.lt.s32.totalorder %s169, 255
          %s171 = scalar_select %p170, %s169, 255
          %s172 = smul.addr %s171, 8
          %s173 = scalar_lea.vmem %s1, %s172
          %s174 = smul.u32 128, %s13
        $region32: #{candidate_filter_forward.1} parent=23 // pred_fallthru
          _
      $region24: #{candidate_filter_forward.1} parent=5 // pred_fallthru
        _
      %p175 = scmp.le.s32.totalorder 1, %s13
      %p176 = scmp.lt.s32.totalorder %s13, 3
      %p177 = pnand %p175, %p176
      %p178 = pneg %p177
      // Predicated region
      $region33: #{candidate_filter_forward.1} parent=5 // pred_check
        _
      $region34: #{candidate_filter_forward.1} parent=5 // pred_check_branch
        %180 = sbr.rel (%p177) target = $region36
      $region35: #{candidate_filter_forward.1} parent=5 // pred_region
        %s181 = ssub.s32 %s13, 1
        %s182 = smul.u32 8, %s18
        %p183 = scmp.lt.s32.totalorder %s182, 15
        %s184 = scalar_select %p183, %s182, 15
        %s185 = scalar_lea.vmem %s0, %s184
        %p186 = pneg %p39
        %p187 = pneg %p36
        %s188 = smul.u32 128, %s18
        %p189 = scmp.lt.s32.totalorder %s188, 255
        %s190 = scalar_select %p189, %s188, 255
        %s191 = smul.addr %s190, 8
        %s192 = scalar_lea.vmem %s1, %s191
        %p193 = pneg %p65
        %p194 = pneg %p62
        %p195 = pneg %p86
        %p196 = pneg %p83
        %p197 = pneg %p107
        %p198 = pneg %p104
        %p199 = pneg %p133
        %p200 = pneg %p130
        %s201 = sand.u32 %s120, 1
        %s202 = scalar_lea.sflag [#allocation3], %s201
        %s203 = sand.u32 %s120, 1
        %s204 = smul.addr %s203, 8
        %s205 = scalar_lea.vmem [#allocation2], %s204
        %s206 = smul.u32 8, %s18
        %p207 = scmp.lt.s32.totalorder %s206, 15
        %s208 = scalar_select %p207, %s206, 15
        %s209 = scalar_lea.vmem %s0, %s208
        %s210 = smul.u32 8, %s18
        %s211 = smul.u32 128, %s18
        %p212 = scmp.lt.s32.totalorder %s211, 255
        %s213 = scalar_select %p212, %s211, 255
        %s214 = smul.addr %s213, 8
        %s215 = scalar_lea.vmem %s1, %s214
        %s216 = smul.u32 128, %s18
        %s217 = smul.u32 8, %s18
        %v218 = vld [vmem:[%s2] sm:$0xff]
        %v219 = vld [vmem:[%s215] sm:$0xff]
        %v220 = vld [vmem:[%s215 + $0x8] sm:$0xff]
        %v221 = vld [vmem:[%s215 + $0x10] sm:$0xff]
        %v222 = vld [vmem:[%s215 + $0x18] sm:$0xff]
        %v223 = vld [vmem:[%s215 + $0x20] sm:$0xff]
        %v224 = vld [vmem:[%s215 + $0x28] sm:$0xff]
        %v225 = vld [vmem:[%s215 + $0x30] sm:$0xff]
        %v226 = vld [vmem:[%s215 + $0x38] sm:$0xff]
        %v227 = vld [vmem:[%s215 + $0x40] sm:$0xff]
        %v228 = vld [vmem:[%s215 + $0x48] sm:$0xff]
        %v229 = vld [vmem:[%s215 + $0x50] sm:$0xff]
        %v230 = vld [vmem:[%s215 + $0x58] sm:$0xff]
        %v231 = vld [vmem:[%s215 + $0x60] sm:$0xff]
        %v232 = vld [vmem:[%s215 + $0x68] sm:$0xff]
        %v233 = vld [vmem:[%s215 + $0x70] sm:$0xff]
        %v234 = vld [vmem:[%s215 + $0x78] sm:$0xff]
        %v235 = vld [vmem:[%s215 + $0x80] sm:$0xff]
        %v236 = vld [vmem:[%s215 + $0x88] sm:$0xff]
        %v237 = vld [vmem:[%s215 + $0x90] sm:$0xff]
        %v238 = vld [vmem:[%s215 + $0x98] sm:$0xff]
        %v239 = vld [vmem:[%s215 + $0xa0] sm:$0xff]
        %v240 = vld [vmem:[%s215 + $0xa8] sm:$0xff]
        %v241 = vld [vmem:[%s215 + $0xb0] sm:$0xff]
        %v242 = vld [vmem:[%s215 + $0xb8] sm:$0xff]
        %v243 = vld [vmem:[%s215 + $0xc0] sm:$0xff]
        %v244 = vld [vmem:[%s215 + $0xc8] sm:$0xff]
        %v245 = vld [vmem:[%s215 + $0xd0] sm:$0xff]
        %v246 = vld [vmem:[%s215 + $0xd8] sm:$0xff]
        %v247 = vld [vmem:[%s215 + $0xe0] sm:$0xff]
        %v248 = vld [vmem:[%s215 + $0xe8] sm:$0xff]
        %v249 = vld [vmem:[%s215 + $0xf0] sm:$0xff]
        %v250 = vld [vmem:[%s215 + $0xf8] sm:$0xff]
        %v251 = vld [vmem:[%s215 + $0x100] sm:$0xff]
        %v252 = vld [vmem:[%s215 + $0x108] sm:$0xff]
        %v253 = vld [vmem:[%s215 + $0x110] sm:$0xff]
        %v254 = vld [vmem:[%s215 + $0x118] sm:$0xff]
        %v255 = vld [vmem:[%s215 + $0x120] sm:$0xff]
        %v256 = vld [vmem:[%s215 + $0x128] sm:$0xff]
        %v257 = vld [vmem:[%s215 + $0x130] sm:$0xff]
        %v258 = vld [vmem:[%s215 + $0x138] sm:$0xff]
        %v259 = vld [vmem:[%s215 + $0x140] sm:$0xff]
        %v260 = vld [vmem:[%s215 + $0x148] sm:$0xff]
        %v261 = vld [vmem:[%s215 + $0x150] sm:$0xff]
        %v262 = vld [vmem:[%s215 + $0x158] sm:$0xff]
        %v263 = vld [vmem:[%s215 + $0x160] sm:$0xff]
        %v264 = vld [vmem:[%s215 + $0x168] sm:$0xff]
        %v265 = vld [vmem:[%s215 + $0x170] sm:$0xff]
        %v266 = vld [vmem:[%s215 + $0x178] sm:$0xff]
        %v267 = vld [vmem:[%s215 + $0x180] sm:$0xff]
        %v268 = vld [vmem:[%s215 + $0x188] sm:$0xff]
        %v269 = vld [vmem:[%s215 + $0x190] sm:$0xff]
        %v270 = vld [vmem:[%s215 + $0x198] sm:$0xff]
        %v271 = vld [vmem:[%s215 + $0x1a0] sm:$0xff]
        %v272 = vld [vmem:[%s215 + $0x1a8] sm:$0xff]
        %v273 = vld [vmem:[%s215 + $0x1b0] sm:$0xff]
        %v274 = vld [vmem:[%s215 + $0x1b8] sm:$0xff]
        %v275 = vld [vmem:[%s215 + $0x1c0] sm:$0xff]
        %v276 = vld [vmem:[%s215 + $0x1c8] sm:$0xff]
        %v277 = vld [vmem:[%s215 + $0x1d0] sm:$0xff]
        %v278 = vld [vmem:[%s215 + $0x1d8] sm:$0xff]
        %v279 = vld [vmem:[%s215 + $0x1e0] sm:$0xff]
        %v280 = vld [vmem:[%s215 + $0x1e8] sm:$0xff]
        %v281 = vld [vmem:[%s215 + $0x1f0] sm:$0xff]
        %v282 = vld [vmem:[%s215 + $0x1f8] sm:$0xff]
        %v283 = vld [vmem:[%s215 + $0x200] sm:$0xff]
        %v284 = vld [vmem:[%s215 + $0x208] sm:$0xff]
        %v285 = vld [vmem:[%s215 + $0x210] sm:$0xff]
        %v286 = vld [vmem:[%s215 + $0x218] sm:$0xff]
        %v287 = vld [vmem:[%s215 + $0x220] sm:$0xff]
        %v288 = vld [vmem:[%s215 + $0x228] sm:$0xff]
        %v289 = vld [vmem:[%s215 + $0x230] sm:$0xff]
        %v290 = vld [vmem:[%s215 + $0x238] sm:$0xff]
        %v291 = vld [vmem:[%s215 + $0x240] sm:$0xff]
        %v292 = vld [vmem:[%s215 + $0x248] sm:$0xff]
        %v293 = vld [vmem:[%s215 + $0x250] sm:$0xff]
        %v294 = vld [vmem:[%s215 + $0x258] sm:$0xff]
        %v295 = vld [vmem:[%s215 + $0x260] sm:$0xff]
        %v296 = vld [vmem:[%s215 + $0x268] sm:$0xff]
        %v297 = vld [vmem:[%s215 + $0x270] sm:$0xff]
        %v298 = vld [vmem:[%s215 + $0x278] sm:$0xff]
        %v299 = vld [vmem:[%s215 + $0x280] sm:$0xff]
        %v300 = vld [vmem:[%s215 + $0x288] sm:$0xff]
        %v301 = vld [vmem:[%s215 + $0x290] sm:$0xff]
        %v302 = vld [vmem:[%s215 + $0x298] sm:$0xff]
        %v303 = vld [vmem:[%s215 + $0x2a0] sm:$0xff]
        %v304 = vld [vmem:[%s215 + $0x2a8] sm:$0xff]
        %v305 = vld [vmem:[%s215 + $0x2b0] sm:$0xff]
        %v306 = vld [vmem:[%s215 + $0x2b8] sm:$0xff]
        %v307 = vld [vmem:[%s215 + $0x2c0] sm:$0xff]
        %v308 = vld [vmem:[%s215 + $0x2c8] sm:$0xff]
        %v309 = vld [vmem:[%s215 + $0x2d0] sm:$0xff]
        %v310 = vld [vmem:[%s215 + $0x2d8] sm:$0xff]
        %v311 = vld [vmem:[%s215 + $0x2e0] sm:$0xff]
        %v312 = vld [vmem:[%s215 + $0x2e8] sm:$0xff]
        %v313 = vld [vmem:[%s215 + $0x2f0] sm:$0xff]
        %v314 = vld [vmem:[%s215 + $0x2f8] sm:$0xff]
        %v315 = vld [vmem:[%s215 + $0x300] sm:$0xff]
        %v316 = vld [vmem:[%s215 + $0x308] sm:$0xff]
        %v317 = vld [vmem:[%s215 + $0x310] sm:$0xff]
        %v318 = vld [vmem:[%s215 + $0x318] sm:$0xff]
        %v319 = vld [vmem:[%s215 + $0x320] sm:$0xff]
        %v320 = vld [vmem:[%s215 + $0x328] sm:$0xff]
        %v321 = vld [vmem:[%s215 + $0x330] sm:$0xff]
        %v322 = vld [vmem:[%s215 + $0x338] sm:$0xff]
        %v323 = vld [vmem:[%s215 + $0x340] sm:$0xff]
        %v324 = vld [vmem:[%s215 + $0x348] sm:$0xff]
        %v325 = vld [vmem:[%s215 + $0x350] sm:$0xff]
        %v326 = vld [vmem:[%s215 + $0x358] sm:$0xff]
        %v327 = vld [vmem:[%s215 + $0x360] sm:$0xff]
        %v328 = vld [vmem:[%s215 + $0x368] sm:$0xff]
        %v329 = vld [vmem:[%s215 + $0x370] sm:$0xff]
        %v330 = vld [vmem:[%s215 + $0x378] sm:$0xff]
        %v331 = vld [vmem:[%s215 + $0x380] sm:$0xff]
        %v332 = vld [vmem:[%s215 + $0x388] sm:$0xff]
        %v333 = vld [vmem:[%s215 + $0x390] sm:$0xff]
        %v334 = vld [vmem:[%s215 + $0x398] sm:$0xff]
        %v335 = vld [vmem:[%s215 + $0x3a0] sm:$0xff]
        %v336 = vld [vmem:[%s215 + $0x3a8] sm:$0xff]
        %v337 = vld [vmem:[%s215 + $0x3b0] sm:$0xff]
        %v338 = vld [vmem:[%s215 + $0x3b8] sm:$0xff]
        %v339 = vld [vmem:[%s215 + $0x3c0] sm:$0xff]
        %v340 = vld [vmem:[%s215 + $0x3c8] sm:$0xff]
        %v341 = vld [vmem:[%s215 + $0x3d0] sm:$0xff]
        %v342 = vld [vmem:[%s215 + $0x3d8] sm:$0xff]
        %v343 = vld [vmem:[%s215 + $0x3e0] sm:$0xff]
        %v344 = vld [vmem:[%s215 + $0x3e8] sm:$0xff]
        %v345 = vld [vmem:[%s215 + $0x3f0] sm:$0xff]
        %v346 = vld [vmem:[%s215 + $0x3f8] sm:$0xff]
        %v347 = vlaneseq
        %v348 = vshrl.u32 %v347, 7
        %v349 = vld [vmem:[%s3] sm:$0xff]
        %351 = vset.pattern.permute.xlu0 0
        %352 = vperm.xlu0 %351, %v349
        %v353 = vpop.permute.xlu0 %352
        %vm355 = vcmask 261120
        %v357 = vsel %vm355, %v218, 0
        %v360 = vsel %vm355, %v219, 0
        %v363 = vsel %vm355, %v220, 0
        %v366 = vsel %vm355, %v221, 0
        %v369 = vsel %vm355, %v222, 0
        %v372 = vsel %vm355, %v223, 0
        %v375 = vsel %vm355, %v224, 0
        %v378 = vsel %vm355, %v225, 0
        %v381 = vsel %vm355, %v226, 0
        %v384 = vsel %vm355, %v227, 0
        %v387 = vsel %vm355, %v228, 0
        %v390 = vsel %vm355, %v229, 0
        %v393 = vsel %vm355, %v230, 0
        %v396 = vsel %vm355, %v231, 0
        %v399 = vsel %vm355, %v232, 0
        %v402 = vsel %vm355, %v233, 0
        %v405 = vsel %vm355, %v234, 0
        %v408 = vsel %vm355, %v235, 0
        %v411 = vsel %vm355, %v236, 0
        %v414 = vsel %vm355, %v237, 0
        %v417 = vsel %vm355, %v238, 0
        %v420 = vsel %vm355, %v239, 0
        %v423 = vsel %vm355, %v240, 0
        %v426 = vsel %vm355, %v241, 0
        %v429 = vsel %vm355, %v242, 0
        %v432 = vsel %vm355, %v243, 0
        %v435 = vsel %vm355, %v244, 0
        %v438 = vsel %vm355, %v245, 0
        %v441 = vsel %vm355, %v246, 0
        %v444 = vsel %vm355, %v247, 0
        %v447 = vsel %vm355, %v248, 0
        %v450 = vsel %vm355, %v249, 0
        %v453 = vsel %vm355, %v250, 0
        %v456 = vsel %vm355, %v251, 0
        %v459 = vsel %vm355, %v252, 0
        %v462 = vsel %vm355, %v253, 0
        %v465 = vsel %vm355, %v254, 0
        %v468 = vsel %vm355, %v255, 0
        %v471 = vsel %vm355, %v256, 0
        %v474 = vsel %vm355, %v257, 0
        %v477 = vsel %vm355, %v258, 0
        %v480 = vsel %vm355, %v259, 0
        %v483 = vsel %vm355, %v260, 0
        %v486 = vsel %vm355, %v261, 0
        %v489 = vsel %vm355, %v262, 0
        %v492 = vsel %vm355, %v263, 0
        %v495 = vsel %vm355, %v264, 0
        %v498 = vsel %vm355, %v265, 0
        %v501 = vsel %vm355, %v266, 0
        %v504 = vsel %vm355, %v267, 0
        %v507 = vsel %vm355, %v268, 0
        %v510 = vsel %vm355, %v269, 0
        %v513 = vsel %vm355, %v270, 0
        %v516 = vsel %vm355, %v271, 0
        %v519 = vsel %vm355, %v272, 0
        %v522 = vsel %vm355, %v273, 0
        %v525 = vsel %vm355, %v274, 0
        %v528 = vsel %vm355, %v275, 0
        %v531 = vsel %vm355, %v276, 0
        %v534 = vsel %vm355, %v277, 0
        %v537 = vsel %vm355, %v278, 0
        %v540 = vsel %vm355, %v279, 0
        %v543 = vsel %vm355, %v280, 0
        %v546 = vsel %vm355, %v281, 0
        %v549 = vsel %vm355, %v282, 0
        %v552 = vsel %vm355, %v283, 0
        %v555 = vsel %vm355, %v284, 0
        %v558 = vsel %vm355, %v285, 0
        %v561 = vsel %vm355, %v286, 0
        %v564 = vsel %vm355, %v287, 0
        %v567 = vsel %vm355, %v288, 0
        %v570 = vsel %vm355, %v289, 0
        %v573 = vsel %vm355, %v290, 0
        %v576 = vsel %vm355, %v291, 0
        %v579 = vsel %vm355, %v292, 0
        %v582 = vsel %vm355, %v293, 0
        %v585 = vsel %vm355, %v294, 0
        %v588 = vsel %vm355, %v295, 0
        %v591 = vsel %vm355, %v296, 0
        %v594 = vsel %vm355, %v297, 0
        %v597 = vsel %vm355, %v298, 0
        %v600 = vsel %vm355, %v299, 0
        %v603 = vsel %vm355, %v300, 0
        %v606 = vsel %vm355, %v301, 0
        %v609 = vsel %vm355, %v302, 0
        %v612 = vsel %vm355, %v303, 0
        %v615 = vsel %vm355, %v304, 0
        %v618 = vsel %vm355, %v305, 0
        %v621 = vsel %vm355, %v306, 0
        %v624 = vsel %vm355, %v307, 0
        %v627 = vsel %vm355, %v308, 0
        %v630 = vsel %vm355, %v309, 0
        %v633 = vsel %vm355, %v310, 0
        %v636 = vsel %vm355, %v311, 0
        %v639 = vsel %vm355, %v312, 0
        %v642 = vsel %vm355, %v313, 0
        %v645 = vsel %vm355, %v314, 0
        %v648 = vsel %vm355, %v315, 0
        %v651 = vsel %vm355, %v316, 0
        %v654 = vsel %vm355, %v317, 0
        %v657 = vsel %vm355, %v318, 0
        %v660 = vsel %vm355, %v319, 0
        %v663 = vsel %vm355, %v320, 0
        %v666 = vsel %vm355, %v321, 0
        %v669 = vsel %vm355, %v322, 0
        %v672 = vsel %vm355, %v323, 0
        %v675 = vsel %vm355, %v324, 0
        %v678 = vsel %vm355, %v325, 0
        %v681 = vsel %vm355, %v326, 0
        %v684 = vsel %vm355, %v327, 0
        %v687 = vsel %vm355, %v328, 0
        %v690 = vsel %vm355, %v329, 0
        %v693 = vsel %vm355, %v330, 0
        %v696 = vsel %vm355, %v331, 0
        %v699 = vsel %vm355, %v332, 0
        %v702 = vsel %vm355, %v333, 0
        %v705 = vsel %vm355, %v334, 0
        %v708 = vsel %vm355, %v335, 0
        %v711 = vsel %vm355, %v336, 0
        %v714 = vsel %vm355, %v337, 0
        %v717 = vsel %vm355, %v338, 0
        %v720 = vsel %vm355, %v339, 0
        %v723 = vsel %vm355, %v340, 0
        %v726 = vsel %vm355, %v341, 0
        %v729 = vsel %vm355, %v342, 0
        %v732 = vsel %vm355, %v343, 0
        %v735 = vsel %vm355, %v344, 0
        %v738 = vsel %vm355, %v345, 0
        %v741 = vsel %vm355, %v346, 0
        %743 = vmatpush.xpose.msra.mxu0 %v405
        %744 = vmatpush.xpose.msra.mxu0 %v402
        %745 = vmatpush.xpose.msra.mxu0 %v399
        %746 = vmatpush.xpose.msra.mxu0 %v396
        %747 = vmatpush.xpose.msra.mxu0 %v393
        %748 = vmatpush.xpose.msra.mxu0 %v390
        %749 = vmatpush.xpose.msra.mxu0 %v387
        %750 = vmatpush.xpose.msra.mxu0 %v384
        %751 = vmatpush.xpose.msra.mxu0 %v381
        %752 = vmatpush.xpose.msra.mxu0 %v378
        %753 = vmatpush.xpose.msra.mxu0 %v375
        %754 = vmatpush.xpose.msra.mxu0 %v372
        %755 = vmatpush.xpose.msra.mxu0 %v369
        %756 = vmatpush.xpose.msra.mxu0 %v366
        %757 = vmatpush.xpose.msra.mxu0 %v363
        %758 = vmatpush.xpose.msra.mxu0 %v360
        %759 = vmatmul.f32.gmra.mxu0 %v357
        %v760 = vpop.f32.mrf.mxu0
        %v761 = vadd.f32 %v353, %v760
        %762 = vdwg.mxu0
        %763 = vmatpush.xpose.msra.mxu0 %v453
        %764 = vmatpush.xpose.msra.mxu0 %v450
        %765 = vmatpush.xpose.msra.mxu0 %v447
        %766 = vmatpush.xpose.msra.mxu0 %v444
        %767 = vmatpush.xpose.msra.mxu0 %v441
        %768 = vmatpush.xpose.msra.mxu0 %v438
        %769 = vmatpush.xpose.msra.mxu0 %v435
        %770 = vmatpush.xpose.msra.mxu0 %v432
        %771 = vmatpush.xpose.msra.mxu0 %v429
        %772 = vmatpush.xpose.msra.mxu0 %v426
        %773 = vmatpush.xpose.msra.mxu0 %v423
        %774 = vmatpush.xpose.msra.mxu0 %v420
        %775 = vmatpush.xpose.msra.mxu0 %v417
        %776 = vmatpush.xpose.msra.mxu0 %v414
        %777 = vmatpush.xpose.msra.mxu0 %v411
        %778 = vmatpush.xpose.msra.mxu0 %v408
        %779 = vmatmul.f32.gmra.mxu0 %v357
        %v780 = vpop.f32.mrf.mxu0
        %v781 = vadd.f32 %v353, %v780
        %782 = vdwg.mxu0
        %783 = vmatpush.xpose.msra.mxu0 %v501
        %784 = vmatpush.xpose.msra.mxu0 %v498
        %785 = vmatpush.xpose.msra.mxu0 %v495
        %786 = vmatpush.xpose.msra.mxu0 %v492
        %787 = vmatpush.xpose.msra.mxu0 %v489
        %788 = vmatpush.xpose.msra.mxu0 %v486
        %789 = vmatpush.xpose.msra.mxu0 %v483
        %790 = vmatpush.xpose.msra.mxu0 %v480
        %791 = vmatpush.xpose.msra.mxu0 %v477
        %792 = vmatpush.xpose.msra.mxu0 %v474
        %793 = vmatpush.xpose.msra.mxu0 %v471
        %794 = vmatpush.xpose.msra.mxu0 %v468
        %795 = vmatpush.xpose.msra.mxu0 %v465
        %796 = vmatpush.xpose.msra.mxu0 %v462
        %797 = vmatpush.xpose.msra.mxu0 %v459
        %798 = vmatpush.xpose.msra.mxu0 %v456
        %799 = vmatmul.f32.gmra.mxu0 %v357
        %v800 = vpop.f32.mrf.mxu0
        %v801 = vadd.f32 %v353, %v800
        %802 = vdwg.mxu0
        %803 = vmatpush.xpose.msra.mxu0 %v549
        %804 = vmatpush.xpose.msra.mxu0 %v546
        %805 = vmatpush.xpose.msra.mxu0 %v543
        %806 = vmatpush.xpose.msra.mxu0 %v540
        %807 = vmatpush.xpose.msra.mxu0 %v537
        %808 = vmatpush.xpose.msra.mxu0 %v534
        %809 = vmatpush.xpose.msra.mxu0 %v531
        %810 = vmatpush.xpose.msra.mxu0 %v528
        %811 = vmatpush.xpose.msra.mxu0 %v525
        %812 = vmatpush.xpose.msra.mxu0 %v522
        %813 = vmatpush.xpose.msra.mxu0 %v519
        %814 = vmatpush.xpose.msra.mxu0 %v516
        %815 = vmatpush.xpose.msra.mxu0 %v513
        %816 = vmatpush.xpose.msra.mxu0 %v510
        %817 = vmatpush.xpose.msra.mxu0 %v507
        %818 = vmatpush.xpose.msra.mxu0 %v504
        %819 = vmatmul.f32.gmra.mxu0 %v357
        %v820 = vpop.f32.mrf.mxu0
        %v821 = vadd.f32 %v353, %v820
        %822 = vdwg.mxu0
        %823 = vmatpush.xpose.msra.mxu0 %v597
        %824 = vmatpush.xpose.msra.mxu0 %v594
        %825 = vmatpush.xpose.msra.mxu0 %v591
        %826 = vmatpush.xpose.msra.mxu0 %v588
        %827 = vmatpush.xpose.msra.mxu0 %v585
        %828 = vmatpush.xpose.msra.mxu0 %v582
        %829 = vmatpush.xpose.msra.mxu0 %v579
        %830 = vmatpush.xpose.msra.mxu0 %v576
        %831 = vmatpush.xpose.msra.mxu0 %v573
        %832 = vmatpush.xpose.msra.mxu0 %v570
        %833 = vmatpush.xpose.msra.mxu0 %v567
        %834 = vmatpush.xpose.msra.mxu0 %v564
        %835 = vmatpush.xpose.msra.mxu0 %v561
        %836 = vmatpush.xpose.msra.mxu0 %v558
        %837 = vmatpush.xpose.msra.mxu0 %v555
        %838 = vmatpush.xpose.msra.mxu0 %v552
        %839 = vmatmul.f32.gmra.mxu0 %v357
        %v840 = vpop.f32.mrf.mxu0
        %v841 = vadd.f32 %v353, %v840
        %842 = vdwg.mxu0
        %843 = vmatpush.xpose.msra.mxu0 %v645
        %844 = vmatpush.xpose.msra.mxu0 %v642
        %845 = vmatpush.xpose.msra.mxu0 %v639
        %846 = vmatpush.xpose.msra.mxu0 %v636
        %847 = vmatpush.xpose.msra.mxu0 %v633
        %848 = vmatpush.xpose.msra.mxu0 %v630
        %849 = vmatpush.xpose.msra.mxu0 %v627
        %850 = vmatpush.xpose.msra.mxu0 %v624
        %851 = vmatpush.xpose.msra.mxu0 %v621
        %852 = vmatpush.xpose.msra.mxu0 %v618
        %853 = vmatpush.xpose.msra.mxu0 %v615
        %854 = vmatpush.xpose.msra.mxu0 %v612
        %855 = vmatpush.xpose.msra.mxu0 %v609
        %856 = vmatpush.xpose.msra.mxu0 %v606
        %857 = vmatpush.xpose.msra.mxu0 %v603
        %858 = vmatpush.xpose.msra.mxu0 %v600
        %859 = vmatmul.f32.gmra.mxu0 %v357
        %v860 = vpop.f32.mrf.mxu0
        %v861 = vadd.f32 %v353, %v860
        %862 = vdwg.mxu0
        %863 = vmatpush.xpose.msra.mxu0 %v693
        %864 = vmatpush.xpose.msra.mxu0 %v690
        %865 = vmatpush.xpose.msra.mxu0 %v687
        %866 = vmatpush.xpose.msra.mxu0 %v684
        %867 = vmatpush.xpose.msra.mxu0 %v681
        %868 = vmatpush.xpose.msra.mxu0 %v678
        %869 = vmatpush.xpose.msra.mxu0 %v675
        %870 = vmatpush.xpose.msra.mxu0 %v672
        %871 = vmatpush.xpose.msra.mxu0 %v669
        %872 = vmatpush.xpose.msra.mxu0 %v666
        %873 = vmatpush.xpose.msra.mxu0 %v663
        %874 = vmatpush.xpose.msra.mxu0 %v660
        %875 = vmatpush.xpose.msra.mxu0 %v657
        %876 = vmatpush.xpose.msra.mxu0 %v654
        %877 = vmatpush.xpose.msra.mxu0 %v651
        %878 = vmatpush.xpose.msra.mxu0 %v648
        %879 = vmatmul.f32.gmra.mxu0 %v357
        %v880 = vpop.f32.mrf.mxu0
        %v881 = vadd.f32 %v353, %v880
        %882 = vdwg.mxu0
        %883 = vmatpush.xpose.msra.mxu0 %v741
        %884 = vmatpush.xpose.msra.mxu0 %v738
        %885 = vmatpush.xpose.msra.mxu0 %v735
        %886 = vmatpush.xpose.msra.mxu0 %v732
        %887 = vmatpush.xpose.msra.mxu0 %v729
        %888 = vmatpush.xpose.msra.mxu0 %v726
        %889 = vmatpush.xpose.msra.mxu0 %v723
        %890 = vmatpush.xpose.msra.mxu0 %v720
        %891 = vmatpush.xpose.msra.mxu0 %v717
        %892 = vmatpush.xpose.msra.mxu0 %v714
        %893 = vmatpush.xpose.msra.mxu0 %v711
        %894 = vmatpush.xpose.msra.mxu0 %v708
        %895 = vmatpush.xpose.msra.mxu0 %v705
        %896 = vmatpush.xpose.msra.mxu0 %v702
        %897 = vmatpush.xpose.msra.mxu0 %v699
        %898 = vmatpush.xpose.msra.mxu0 %v696
        %899 = vmatmul.f32.gmra.mxu0 %v357
        %v900 = vpop.f32.mrf.mxu0
        %v901 = vadd.f32 %v353, %v900
        %902 = vdwg.mxu0
        %v903 = vld [vmem:[%s209] sm:$0xff]
        %v904 = vperm.slane %v903, 0
        %v905 = vperm.slane %v903, 1
        %v906 = vperm.slane %v903, 2
        %v907 = vperm.slane %v903, 3
        %v908 = vperm.slane %v903, 4
        %v909 = vperm.slane %v903, 5
        %v910 = vperm.slane %v903, 6
        %v911 = vperm.slane %v903, 7
        %vm912 = vcmp.eq.s32.totalorder %v348, %v904
        %vm913 = vcmp.eq.s32.totalorder %v348, %v905
        %vm914 = vcmp.eq.s32.totalorder %v348, %v906
        %vm915 = vcmp.eq.s32.totalorder %v348, %v907
        %vm916 = vcmp.eq.s32.totalorder %v348, %v908
        %vm917 = vcmp.eq.s32.totalorder %v348, %v909
        %vm918 = vcmp.eq.s32.totalorder %v348, %v910
        %vm919 = vcmp.eq.s32.totalorder %v348, %v911
        %v920 = vsel %vm912, %v761, 0.0
        %v921 = vsel %vm913, %v781, 0.0
        %v922 = vsel %vm914, %v801, 0.0
        %v923 = vsel %vm915, %v821, 0.0
        %v924 = vsel %vm916, %v841, 0.0
        %v925 = vsel %vm917, %v861, 0.0
        %v926 = vsel %vm918, %v881, 0.0
        %v927 = vsel %vm919, %v901, 0.0
        %v928 = vrot.slane %v920, 4
        %v929 = vadd.f32 %v920, %v928
        %v930 = vrot.slane %v929, 2
        %v931 = vadd.f32 %v929, %v930
        %v932 = vrot.slane %v931, 1
        %v933 = vadd.f32 %v931, %v932
        %v934 = vrot.slane %v921, 4
        %v935 = vadd.f32 %v921, %v934
        %v936 = vrot.slane %v935, 2
        %v937 = vadd.f32 %v935, %v936
        %v938 = vrot.slane %v937, 1
        %v939 = vadd.f32 %v937, %v938
        %v940 = vrot.slane %v922, 4
        %v941 = vadd.f32 %v922, %v940
        %v942 = vrot.slane %v941, 2
        %v943 = vadd.f32 %v941, %v942
        %v944 = vrot.slane %v943, 1
        %v945 = vadd.f32 %v943, %v944
        %v946 = vrot.slane %v923, 4
        %v947 = vadd.f32 %v923, %v946
        %v948 = vrot.slane %v947, 2
        %v949 = vadd.f32 %v947, %v948
        %v950 = vrot.slane %v949, 1
        %v951 = vadd.f32 %v949, %v950
        %v952 = vrot.slane %v924, 4
        %v953 = vadd.f32 %v924, %v952
        %v954 = vrot.slane %v953, 2
        %v955 = vadd.f32 %v953, %v954
        %v956 = vrot.slane %v955, 1
        %v957 = vadd.f32 %v955, %v956
        %v958 = vrot.slane %v925, 4
        %v959 = vadd.f32 %v925, %v958
        %v960 = vrot.slane %v959, 2
        %v961 = vadd.f32 %v959, %v960
        %v962 = vrot.slane %v961, 1
        %v963 = vadd.f32 %v961, %v962
        %v964 = vrot.slane %v926, 4
        %v965 = vadd.f32 %v926, %v964
        %v966 = vrot.slane %v965, 2
        %v967 = vadd.f32 %v965, %v966
        %v968 = vrot.slane %v967, 1
        %v969 = vadd.f32 %v967, %v968
        %v970 = vrot.slane %v927, 4
        %v971 = vadd.f32 %v927, %v970
        %v972 = vrot.slane %v971, 2
        %v973 = vadd.f32 %v971, %v972
        %v974 = vrot.slane %v973, 1
        %v975 = vadd.f32 %v973, %v974
        %v984 = vrot.slane %v939, 7
        %v985 = vrot.slane %v945, 6
        %v986 = vrot.slane %v951, 5
        %v987 = vrot.slane %v957, 4
        %v988 = vrot.slane %v963, 3
        %v989 = vrot.slane %v969, 2
        %v990 = vrot.slane %v975, 1
        %vm991 = vcmask 1040384
        %v992 = vsel %vm991, %v933, %v984
        %vm993 = vcmask 1042434
        %v994 = vsel %vm993, %v985, %v986
        %vm995 = vcmask 1041408
        %v996 = vsel %vm995, %v992, %v994
        %vm997 = vcmask 1044484
        %v998 = vsel %vm997, %v987, %v988
        %vm999 = vcmask 1046534
        %v1000 = vsel %vm999, %v989, %v990
        %vm1001 = vcmask 1045508
        %v1002 = vsel %vm1001, %v998, %v1000
        %vm1003 = vcmask 1043456
        %v1004 = vsel %vm1003, %v996, %v1002
        %1006 = vst [vmem:[%s205] sm:$0xff] %v1004
        %s1007 = sand.u32 %s120, 1
        %s1008 = scalar_lea.sflag [#allocation3], %s1007
        %s1009 = sand.u32 %s120, 1
        %s1010 = smul.addr %s1009, 8
        %s1011 = scalar_lea.vmem [#allocation2], %s1010
        // Predicated region
        $region37: #{candidate_filter_forward.1} parent=35 // pred_check
          %p1012 = pneg %p130
        $region38: #{candidate_filter_forward.1} parent=35 // pred_check_branch
          %1014 = sbr.rel (%p1012) target = $region40
        $region39: #{candidate_filter_forward.1} parent=35 // pred_region
          %s1015 = smul.u32 8, %s18
          %1017 = vsyncadd %s1008, 0
          %s1018 = scalar_lea.hbm %s4, %s1015
          %s1020 = sshll.u32 %s1011, 4
          %s1021 = int_to_ptr.vmem [resolvable:$true] %s1020
          %s1022 = sshll.u32 %s1018, 4
          %s1023 = int_to_ptr.hbm [resolvable:$true] %s1022
          %1025 = dma.vmem_to_hbm [thread:$0]  %s1021, 128, %s1023, %s1008
        $region40: #{candidate_filter_forward.1} parent=35 // pred_fallthru
          _
      $region36: #{candidate_filter_forward.1} parent=5 // pred_fallthru
        _
      %p1026 = scmp.le.s32.totalorder 2, %s13
      // Predicated region
      $region41: #{candidate_filter_forward.1} parent=5 // pred_check
        %p1027 = pneg %p1026
      $region42: #{candidate_filter_forward.1} parent=5 // pred_check_branch
        %1029 = sbr.rel (%p1027) target = $region44
      $region43: #{candidate_filter_forward.1} parent=5 // pred_region
        %s1030 = ssub.s32 %s13, 2
        // Predicated region
        $region45: #{candidate_filter_forward.1} parent=43 // pred_check
          %p1031 = pneg %p136
        $region46: #{candidate_filter_forward.1} parent=43 // pred_check_branch
          %1033 = sbr.rel (%p1031) target = $region48
        $region47: #{candidate_filter_forward.1} parent=43 // pred_region
          %s1034 = sand.u32 %s121, 1
          %s1035 = scalar_lea.sflag [#allocation3], %s1034
          %s1036 = sand.u32 %s121, 1
          %s1037 = smul.addr %s1036, 8
          %s1038 = scalar_lea.vmem [#allocation2], %s1037
          %1040 = dma.done %s1035, 128
        $region48: #{candidate_filter_forward.1} parent=43 // pred_fallthru
          _
      $region44: #{candidate_filter_forward.1} parent=5 // pred_fallthru
        _
    $region6: #{candidate_filter_forward.1} parent=1 // loop_footer
      %s17 = sadd.s32 1, %s13
    $region7: #{candidate_filter_forward.1} parent=1 // loop_footer_branch
      %12 = sbr.rel target = $region3
    $region8: #{candidate_filter_forward.1} parent=1 // loop_exit
      _
    %1041 = vsyncpa [#allocation3], 1
    %s1042 = scalar_lea.sflag [#allocation3], 1
    %1043 = vsyncpa %s1042, 1

</llo_original>
